<compile_context>
chip_gen: v5e
topology: v5e:2x2
jax: 0.10.0
libtpu: 0.0.40
codegen_flags: <defaults>
</compile_context>

<pallas_src>
import numpy as np
import jax
import jax.numpy as jnp
from jax import lax
from jax.experimental import pallas as pl
from jax.experimental.pallas import tpu as pltpu


def _sphere_block_kernel(x_ref, sh_ref, t1_ref, t2_ref, b1_ref, b2_ref,
                         out_ref):
    """One batch *group* (G images packed along lanes) per grid step.

    x_ref  : (H, Lin)        bf16 input in packed band layout (also the residual)
    sh_ref : (2, H, H)       bf16 0/1 row-shift matrices [down, up]
    t1_ref : (3, Lin, L)     bf16 conv1 band weights, block-diag over the group
                             (BN1 scale folded in)
    t2_ref : (3, L,   L)     bf16 conv2 band weights (BN2 scale folded in)
    b1_ref : (1, L)          f32 BN1 shift, tiled per (group, col, channel) lane
    b2_ref : (1, L)          f32 BN2 shift
    out_ref: (H, L)          f32 block output (lane-dense, >= 128 lanes)
    """
    x = x_ref[...]                      # (H, Lin) bf16
    sdn = sh_ref[0]                     # (sdn @ v)[i] = v[i-1], row 0     -> 0
    sup = sh_ref[1]                     # (sup @ v)[i] = v[i+1], row H-1   -> 0

    def band_conv3x3(v, t_ref):
        """3x3 conv on band-layout v via 3 MXU matmuls (ky = 0, 1, 2)."""
        # Vertical halo as 0/1 matmuls: exact, no padded scratch needed, and
        # the shift is shared across all images packed along the lane axis.
        up = jnp.dot(sdn, v, preferred_element_type=jnp.float32).astype(v.dtype)
        dn = jnp.dot(sup, v, preferred_element_type=jnp.float32).astype(v.dtype)
        acc = jnp.dot(up, t_ref[0], preferred_element_type=jnp.float32)
        acc += jnp.dot(v, t_ref[1], preferred_element_type=jnp.float32)
        acc += jnp.dot(dn, t_ref[2], preferred_element_type=jnp.float32)
        return acc                      # f32 (H, L)

    # conv1 -> bn1 (scale folded into t1, shift added here) -> relu
    out1 = jnp.maximum(band_conv3x3(x, t1_ref) + b1_ref[...], 0.0)

    # conv2 -> bn2 -> + residual (read from x itself) -> relu
    out2 = band_conv3x3(out1.astype(x.dtype), t2_ref) + b2_ref[...]
    out_ref[...] = jnp.maximum(out2 + x.astype(jnp.float32), 0.0)


def _band_toeplitz(w_hwio, W):
    """(3,3,Cin,Cout) conv weights -> (3, W*Cin, W*Cout) band matrices (numpy).

    T[ky][jj*Cin + ci, j*Cout + co] = w[ky, jj - j + 1, ci, co] for |jj-j| <= 1,
    else 0: the horizontal taps and the width-direction zero padding are folded
    into the matrix (host-side constant folding; runs once outside the kernel).
    """
    w = np.asarray(w_hwio, np.float32)
    KH, KW, Cin, Cout = w.shape
    t = np.zeros((KH, W * Cin, W * Cout), np.float32)
    for ky in range(KH):
        for j in range(W):
            for kx in range(KW):
                jj = j + kx - 1
                if 0 <= jj < W:
                    t[ky, jj * Cin:(jj + 1) * Cin,
                      j * Cout:(j + 1) * Cout] = w[ky, kx]
    return t


def _block_diag(t, G):
    """(KH, R, S) -> (KH, G*R, G*S) block-diagonal (one block per packed image)."""
    if G == 1:
        return t
    KH, R, S = t.shape
    out = np.zeros((KH, G * R, G * S), t.dtype)
    for g in range(G):
        out[:, g * R:(g + 1) * R, g * S:(g + 1) * S] = t
    return out


def sphere_basic_block(x_nchw, params, *, stride=1):
    """Pallas implementation of SphereBasicBlock.forward (stride=1, no downsample)."""
    assert stride == 1, "TODO(synk): stride>1 / downsample not implemented"
    w1, w2, s1, b1, s2, b2 = params          # w: HWIO, s/b: (C,) folded BN
    N, Cin, H, W = x_nchw.shape
    C = w1.shape[-1]
    assert Cin == C, "identity residual requires inplanes == planes"
    WC = W * C
    WCin = W * Cin

    # Pack G images per grid step along the lane axis so the output store is
    # lane-dense (>= 128 lanes) and the grid has fewer (expensive) steps.
    G = max(1, 128 // WC)
    NB = -(-N // G)                     # number of grid steps (ceil)
    N_pad = NB * G
    Lin = G * WCin
    L = G * WC

    # NCHW -> NHWC -> band layout (N, H, W*C); pad batch to a multiple of G and
    # pack groups of G images along the lane axis.  bf16 halves HBM traffic and
    # feeds the MXU directly.  (All of this is wrapper-side layout plumbing.)
    x_band = jnp.transpose(x_nchw, (0, 2, 3, 1)).reshape(N, H, WCin)
    if N_pad != N:
        x_band = jnp.concatenate(
            [x_band, jnp.zeros((N_pad - N, H, WCin), x_band.dtype)], axis=0)
    x_grp = (x_band.reshape(NB, G, H, WCin)
                   .transpose(0, 2, 1, 3)
                   .reshape(NB, H, Lin)
                   .astype(jnp.bfloat16))

    # Host-side constant folding: BN scale into conv weights, horizontal taps
    # and W-padding into band-Toeplitz matrices, group packing into a
    # block-diagonal weight (shared weights, one diagonal block per image).
    w1s = np.asarray(w1, np.float32) * np.asarray(s1, np.float32)[None, None, None, :]
    w2s = np.asarray(w2, np.float32) * np.asarray(s2, np.float32)[None, None, None, :]
    t1 = jnp.asarray(_block_diag(_band_toeplitz(w1s, W), G), jnp.bfloat16)  # (3,Lin,L)
    t2 = jnp.asarray(_block_diag(_band_toeplitz(w2s, W), G), jnp.bfloat16)  # (3,L,  L)
    b1t = jnp.tile(jnp.asarray(b1, jnp.float32), G * W).reshape(1, L)
    b2t = jnp.tile(jnp.asarray(b2, jnp.float32), G * W).reshape(1, L)

    # 0/1 vertical shift matrices (sub-/super-diagonal eye).
    sh = jnp.stack([jnp.eye(H, k=-1), jnp.eye(H, k=1)]).astype(jnp.bfloat16)

    out_grp = pl.pallas_call(
        _sphere_block_kernel,
        out_shape=jax.ShapeDtypeStruct((NB, H, L), jnp.float32),
        grid_spec=pltpu.PrefetchScalarGridSpec(
            num_scalar_prefetch=0,
            grid=(NB,),
            in_specs=[
                pl.BlockSpec((None, H, Lin), lambda n: (n, 0, 0)),
                pl.BlockSpec((2, H, H), lambda n: (0, 0, 0)),
                pl.BlockSpec((3, Lin, L), lambda n: (0, 0, 0)),
                pl.BlockSpec((3, L, L), lambda n: (0, 0, 0)),
                pl.BlockSpec((1, L), lambda n: (0, 0)),
                pl.BlockSpec((1, L), lambda n: (0, 0)),
            ],
            out_specs=pl.BlockSpec((None, H, L), lambda n: (n, 0, 0)),
        ),
        compiler_params=pltpu.CompilerParams(
            dimension_semantics=("parallel",)),
    )(x_grp, sh, t1, t2, b1t, b2t)

    # packed band -> band -> NHWC -> NCHW (free layout plumbing outside kernel).
    out_band = (out_grp.reshape(NB, H, G, WC)
                       .transpose(0, 2, 1, 3)
                       .reshape(N_pad, H, W, C)[:N])
    return jnp.transpose(out_band, (0, 3, 1, 2))


def init_params(key, inplanes, planes, eps=1e-5):
    """Deterministic synthetic parameters (conv weights + folded BN)."""
    ks = jax.random.split(key, 12)
    w1 = jax.random.normal(ks[0], (3, 3, inplanes, planes), jnp.float32) \
        * (2.0 / (9 * inplanes)) ** 0.5
    w2 = jax.random.normal(ks[1], (3, 3, planes, planes), jnp.float32) \
        * (2.0 / (9 * planes)) ** 0.5

    def bn(kg, kb, km, kv):
        gamma = 1.0 + 0.1 * jax.random.normal(kg, (planes,), jnp.float32)
        beta = 0.1 * jax.random.normal(kb, (planes,), jnp.float32)
        mean = 0.1 * jax.random.normal(km, (planes,), jnp.float32)
        var = jax.random.uniform(kv, (planes,), jnp.float32, 0.5, 1.5)
        scale = gamma / jnp.sqrt(var + eps)
        shift = beta - mean * scale
        return scale, shift

    s1, b1 = bn(ks[2], ks[3], ks[4], ks[5])
    s2, b2 = bn(ks[6], ks[7], ks[8], ks[9])
    return w1, w2, s1, b1, s2, b2


def _reference_forward(x_nchw, params):
    """Pure-JAX f32 reference (lax.conv) for correctness check."""
    w1, w2, s1, b1, s2, b2 = params
    x = jnp.transpose(x_nchw, (0, 2, 3, 1))
    dn = lax.conv_dimension_numbers(x.shape, w1.shape, ('NHWC', 'HWIO', 'NHWC'))
    y = lax.conv_general_dilated(x, w1, (1, 1), ((1, 1), (1, 1)),
                                 dimension_numbers=dn)
    y = jnp.maximum(y * s1 + b1, 0.0)
    y = lax.conv_general_dilated(y, w2, (1, 1), ((1, 1), (1, 1)),
                                 dimension_numbers=dn)
    y = jnp.maximum(y * s2 + b2 + x, 0.0)
    return jnp.transpose(y, (0, 3, 1, 2))


if __name__ == "__main__":
    key = jax.random.PRNGKey(0)
    kx, kp = jax.random.split(key)

    # PyTorch-style NCHW input: batch=2, inplanes=planes=4, 16x16 spatial.
    x = jax.random.normal(kx, (2, 4, 16, 16), jnp.float32)
    params = init_params(kp, inplanes=4, planes=4)

    out = jax.block_until_ready(sphere_basic_block(x, params))
    ref = _reference_forward(x, params)

    assert out.shape == (2, 4, 16, 16)
    # bf16 MXU inputs -> loosened tolerance vs the f32 reference.
    assert jnp.allclose(out, ref, atol=5e-2, rtol=5e-2), \
        f"max abs err {jnp.max(jnp.abs(out - ref))}"
    print("KERNEL_OK")
</pallas_src>

<mosaic_0001>
module attributes {stable_mosaic.version = 11 : i64} {
  func.func @_sphere_block_kernel(%arg0: i32, %arg1: memref<1x16x128xbf16, #tpu.memory_space<vmem>>, %arg2: memref<2x16x16xbf16, #tpu.memory_space<vmem>>, %arg3: memref<3x128x128xbf16, #tpu.memory_space<vmem>>, %arg4: memref<3x128x128xbf16, #tpu.memory_space<vmem>>, %arg5: memref<1x128xf32, #tpu.memory_space<vmem>>, %arg6: memref<1x128xf32, #tpu.memory_space<vmem>>, %arg7: memref<1x16x128xf32, #tpu.memory_space<vmem>>) attributes {dimension_semantics = [#tpu.dimension_semantics<parallel>], iteration_bounds = array<i64: 1>, scalar_prefetch = 0 : i64, scratch_operands = 0 : i64, tpu.core_type = #tpu.core_type<tc>, window_params = [{transform_indices = @transform_0, window_bounds = array<i64: 1, 16, 128>}, {pipeline_mode = #tpu.pipeline_mode<synchronous>, transform_indices = @transform_1, window_bounds = array<i64: 2, 16, 16>}, {pipeline_mode = #tpu.pipeline_mode<synchronous>, transform_indices = @transform_2, window_bounds = array<i64: 3, 128, 128>}, {pipeline_mode = #tpu.pipeline_mode<synchronous>, transform_indices = @transform_3, window_bounds = array<i64: 3, 128, 128>}, {pipeline_mode = #tpu.pipeline_mode<synchronous>, transform_indices = @transform_4, window_bounds = array<i64: 1, 128>}, {pipeline_mode = #tpu.pipeline_mode<synchronous>, transform_indices = @transform_5, window_bounds = array<i64: 1, 128>}, {transform_indices = @transform_6, window_bounds = array<i64: 1, 16, 128>}]} {
    %c0 = arith.constant 0 : index
    %c0_0 = arith.constant 0 : index
    %c0_1 = arith.constant 0 : index
    %0 = vector.load %arg1[%c0, %c0_0, %c0_1] : memref<1x16x128xbf16, #tpu.memory_space<vmem>>, vector<1x16x128xbf16>
    %1 = vector.shape_cast %0 : vector<1x16x128xbf16> to vector<16x128xbf16>
    %c0_2 = arith.constant 0 : index
    %c0_3 = arith.constant 0 : index
    %c0_4 = arith.constant 0 : index
    %2 = vector.load %arg2[%c0_2, %c0_3, %c0_4] : memref<2x16x16xbf16, #tpu.memory_space<vmem>>, vector<1x16x16xbf16>
    %3 = vector.shape_cast %2 : vector<1x16x16xbf16> to vector<16x16xbf16>
    %c1 = arith.constant 1 : index
    %c0_5 = arith.constant 0 : index
    %c0_6 = arith.constant 0 : index
    %4 = vector.load %arg2[%c1, %c0_5, %c0_6] : memref<2x16x16xbf16, #tpu.memory_space<vmem>>, vector<1x16x16xbf16>
    %5 = vector.shape_cast %4 : vector<1x16x16xbf16> to vector<16x16xbf16>
    %cst = arith.constant dense<0.000000e+00> : vector<16x128xf32>
    %6 = tpu.matmul %3, %1, %cst {dimension_numbers = #tpu.dot_dimension_numbers<[1], [0], [0], [1], [0, 0, 1, 1], [], []>} : vector<16x16xbf16>, vector<16x128xbf16>, vector<16x128xf32> -> vector<16x128xf32>
    %7 = arith.truncf %6 : vector<16x128xf32> to vector<16x128xbf16>
    %cst_7 = arith.constant dense<0.000000e+00> : vector<16x128xf32>
    %8 = tpu.matmul %5, %1, %cst_7 {dimension_numbers = #tpu.dot_dimension_numbers<[1], [0], [0], [1], [0, 0, 1, 1], [], []>} : vector<16x16xbf16>, vector<16x128xbf16>, vector<16x128xf32> -> vector<16x128xf32>
    %9 = arith.truncf %8 : vector<16x128xf32> to vector<16x128xbf16>
    %c0_8 = arith.constant 0 : index
    %c0_9 = arith.constant 0 : index
    %c0_10 = arith.constant 0 : index
    %10 = vector.load %arg3[%c0_8, %c0_9, %c0_10] : memref<3x128x128xbf16, #tpu.memory_space<vmem>>, vector<1x128x128xbf16>
    %11 = vector.shape_cast %10 : vector<1x128x128xbf16> to vector<128x128xbf16>
    %cst_11 = arith.constant dense<0.000000e+00> : vector<16x128xf32>
    %12 = tpu.matmul %7, %11, %cst_11 {dimension_numbers = #tpu.dot_dimension_numbers<[1], [0], [0], [1], [0, 0, 1, 1], [], []>} : vector<16x128xbf16>, vector<128x128xbf16>, vector<16x128xf32> -> vector<16x128xf32>
    %c1_12 = arith.constant 1 : index
    %c0_13 = arith.constant 0 : index
    %c0_14 = arith.constant 0 : index
    %13 = vector.load %arg3[%c1_12, %c0_13, %c0_14] : memref<3x128x128xbf16, #tpu.memory_space<vmem>>, vector<1x128x128xbf16>
    %14 = vector.shape_cast %13 : vector<1x128x128xbf16> to vector<128x128xbf16>
    %cst_15 = arith.constant dense<0.000000e+00> : vector<16x128xf32>
    %15 = tpu.matmul %1, %14, %cst_15 {dimension_numbers = #tpu.dot_dimension_numbers<[1], [0], [0], [1], [0, 0, 1, 1], [], []>} : vector<16x128xbf16>, vector<128x128xbf16>, vector<16x128xf32> -> vector<16x128xf32>
    %16 = arith.addf %12, %15 : vector<16x128xf32>
    %c2 = arith.constant 2 : index
    %c0_16 = arith.constant 0 : index
    %c0_17 = arith.constant 0 : index
    %17 = vector.load %arg3[%c2, %c0_16, %c0_17] : memref<3x128x128xbf16, #tpu.memory_space<vmem>>, vector<1x128x128xbf16>
    %18 = vector.shape_cast %17 : vector<1x128x128xbf16> to vector<128x128xbf16>
    %cst_18 = arith.constant dense<0.000000e+00> : vector<16x128xf32>
    %19 = tpu.matmul %9, %18, %cst_18 {dimension_numbers = #tpu.dot_dimension_numbers<[1], [0], [0], [1], [0, 0, 1, 1], [], []>} : vector<16x128xbf16>, vector<128x128xbf16>, vector<16x128xf32> -> vector<16x128xf32>
    %20 = arith.addf %16, %19 : vector<16x128xf32>
    %c0_19 = arith.constant 0 : index
    %c0_20 = arith.constant 0 : index
    %21 = vector.load %arg5[%c0_19, %c0_20] : memref<1x128xf32, #tpu.memory_space<vmem>>, vector<1x128xf32>
    %22 = vector.broadcast %21 : vector<1x128xf32> to vector<16x128xf32>
    %23 = arith.addf %20, %22 : vector<16x128xf32>
    %cst_21 = arith.constant 0.000000e+00 : f32
    %24 = vector.broadcast %cst_21 : f32 to vector<16x128xf32>
    %25 = arith.maximumf %23, %24 : vector<16x128xf32>
    %26 = arith.truncf %25 : vector<16x128xf32> to vector<16x128xbf16>
    %cst_22 = arith.constant dense<0.000000e+00> : vector<16x128xf32>
    %27 = tpu.matmul %3, %26, %cst_22 {dimension_numbers = #tpu.dot_dimension_numbers<[1], [0], [0], [1], [0, 0, 1, 1], [], []>} : vector<16x16xbf16>, vector<16x128xbf16>, vector<16x128xf32> -> vector<16x128xf32>
    %28 = arith.truncf %27 : vector<16x128xf32> to vector<16x128xbf16>
    %cst_23 = arith.constant dense<0.000000e+00> : vector<16x128xf32>
    %29 = tpu.matmul %5, %26, %cst_23 {dimension_numbers = #tpu.dot_dimension_numbers<[1], [0], [0], [1], [0, 0, 1, 1], [], []>} : vector<16x16xbf16>, vector<16x128xbf16>, vector<16x128xf32> -> vector<16x128xf32>
    %30 = arith.truncf %29 : vector<16x128xf32> to vector<16x128xbf16>
    %c0_24 = arith.constant 0 : index
    %c0_25 = arith.constant 0 : index
    %c0_26 = arith.constant 0 : index
    %31 = vector.load %arg4[%c0_24, %c0_25, %c0_26] : memref<3x128x128xbf16, #tpu.memory_space<vmem>>, vector<1x128x128xbf16>
    %32 = vector.shape_cast %31 : vector<1x128x128xbf16> to vector<128x128xbf16>
    %cst_27 = arith.constant dense<0.000000e+00> : vector<16x128xf32>
    %33 = tpu.matmul %28, %32, %cst_27 {dimension_numbers = #tpu.dot_dimension_numbers<[1], [0], [0], [1], [0, 0, 1, 1], [], []>} : vector<16x128xbf16>, vector<128x128xbf16>, vector<16x128xf32> -> vector<16x128xf32>
    %c1_28 = arith.constant 1 : index
    %c0_29 = arith.constant 0 : index
    %c0_30 = arith.constant 0 : index
    %34 = vector.load %arg4[%c1_28, %c0_29, %c0_30] : memref<3x128x128xbf16, #tpu.memory_space<vmem>>, vector<1x128x128xbf16>
    %35 = vector.shape_cast %34 : vector<1x128x128xbf16> to vector<128x128xbf16>
    %cst_31 = arith.constant dense<0.000000e+00> : vector<16x128xf32>
    %36 = tpu.matmul %26, %35, %cst_31 {dimension_numbers = #tpu.dot_dimension_numbers<[1], [0], [0], [1], [0, 0, 1, 1], [], []>} : vector<16x128xbf16>, vector<128x128xbf16>, vector<16x128xf32> -> vector<16x128xf32>
    %37 = arith.addf %33, %36 : vector<16x128xf32>
    %c2_32 = arith.constant 2 : index
    %c0_33 = arith.constant 0 : index
    %c0_34 = arith.constant 0 : index
    %38 = vector.load %arg4[%c2_32, %c0_33, %c0_34] : memref<3x128x128xbf16, #tpu.memory_space<vmem>>, vector<1x128x128xbf16>
    %39 = vector.shape_cast %38 : vector<1x128x128xbf16> to vector<128x128xbf16>
    %cst_35 = arith.constant dense<0.000000e+00> : vector<16x128xf32>
    %40 = tpu.matmul %30, %39, %cst_35 {dimension_numbers = #tpu.dot_dimension_numbers<[1], [0], [0], [1], [0, 0, 1, 1], [], []>} : vector<16x128xbf16>, vector<128x128xbf16>, vector<16x128xf32> -> vector<16x128xf32>
    %41 = arith.addf %37, %40 : vector<16x128xf32>
    %c0_36 = arith.constant 0 : index
    %c0_37 = arith.constant 0 : index
    %42 = vector.load %arg6[%c0_36, %c0_37] : memref<1x128xf32, #tpu.memory_space<vmem>>, vector<1x128xf32>
    %43 = vector.broadcast %42 : vector<1x128xf32> to vector<16x128xf32>
    %44 = arith.addf %41, %43 : vector<16x128xf32>
    %45 = arith.extf %1 : vector<16x128xbf16> to vector<16x128xf32>
    %46 = arith.addf %44, %45 : vector<16x128xf32>
    %cst_38 = arith.constant 0.000000e+00 : f32
    %47 = vector.broadcast %cst_38 : f32 to vector<16x128xf32>
    %48 = arith.maximumf %46, %47 : vector<16x128xf32>
    %c0_39 = arith.constant 0 : index
    %c0_40 = arith.constant 0 : index
    %c0_41 = arith.constant 0 : index
    %49 = vector.load %arg7[%c0_39, %c0_40, %c0_41] : memref<1x16x128xf32, #tpu.memory_space<vmem>>, vector<1x16x128xf32>
    %50 = vector.shape_cast %49 : vector<1x16x128xf32> to vector<16x128xf32>
    %51 = vector.shape_cast %48 : vector<16x128xf32> to vector<1x16x128xf32>
    tpu.vector_store %arg7[%c0_39, %c0_40, %c0_41], %51 {strides = array<i32>} : memref<1x16x128xf32, #tpu.memory_space<vmem>>, vector<1x16x128xf32>,
    return
  }
  func.func @transform_0(%arg0: i32) -> (i32, i32, i32) {
    %c0_i32 = arith.constant 0 : i32
    %c0_i32_0 = arith.constant 0 : i32
    %c0_i32_1 = arith.constant 0 : i32
    return %arg0, %c0_i32, %c0_i32_0 : i32, i32, i32
  }
  func.func @transform_1(%arg0: i32) -> (i32, i32, i32) {
    %c0_i32 = arith.constant 0 : i32
    %c0_i32_0 = arith.constant 0 : i32
    %c0_i32_1 = arith.constant 0 : i32
    %c0_i32_2 = arith.constant 0 : i32
    return %c0_i32, %c0_i32_0, %c0_i32_1 : i32, i32, i32
  }
  func.func @transform_2(%arg0: i32) -> (i32, i32, i32) {
    %c0_i32 = arith.constant 0 : i32
    %c0_i32_0 = arith.constant 0 : i32
    %c0_i32_1 = arith.constant 0 : i32
    %c0_i32_2 = arith.constant 0 : i32
    return %c0_i32, %c0_i32_0, %c0_i32_1 : i32, i32, i32
  }
  func.func @transform_3(%arg0: i32) -> (i32, i32, i32) {
    %c0_i32 = arith.constant 0 : i32
    %c0_i32_0 = arith.constant 0 : i32
    %c0_i32_1 = arith.constant 0 : i32
    %c0_i32_2 = arith.constant 0 : i32
    return %c0_i32, %c0_i32_0, %c0_i32_1 : i32, i32, i32
  }
  func.func @transform_4(%arg0: i32) -> (i32, i32) {
    %c0_i32 = arith.constant 0 : i32
    %c0_i32_0 = arith.constant 0 : i32
    %c0_i32_1 = arith.constant 0 : i32
    return %c0_i32, %c0_i32_0 : i32, i32
  }
  func.func @transform_5(%arg0: i32) -> (i32, i32) {
    %c0_i32 = arith.constant 0 : i32
    %c0_i32_0 = arith.constant 0 : i32
    %c0_i32_1 = arith.constant 0 : i32
    return %c0_i32, %c0_i32_0 : i32, i32
  }
  func.func @transform_6(%arg0: i32) -> (i32, i32, i32) {
    %c0_i32 = arith.constant 0 : i32
    %c0_i32_0 = arith.constant 0 : i32
    %c0_i32_1 = arith.constant 0 : i32
    return %arg0, %c0_i32, %c0_i32_0 : i32, i32, i32
  }
}

</mosaic_0001>

<llo_original>
// kernel: tpu_custom_call.1
$region0: #{tpu_custom_call.1}
  #allocation0 [shape = 'u32[]', space=smem, size = 0x4, offset = 0x4, fixed_abs, tag = 'smem constant byte address 0x4 - core index']
  #allocation1 [shape = 'u32[72,128]{1,0:T(1,128)}', space=vmem, size = 0x9000, scoped, tag = 'internal scratch']
  %s0 = inlined_call_operand.hbm [shape: bf16[1,16,128], index: 0, kind: input, shape index: {}]
  %s1 = inlined_call_operand.hbm [shape: bf16[2,16,16], index: 1, kind: input, shape index: {}]
  %s2 = inlined_call_operand.hbm [shape: bf16[3,128,128], index: 2, kind: input, shape index: {}]
  %s3 = inlined_call_operand.hbm [shape: bf16[3,128,128], index: 3, kind: input, shape index: {}]
  %s4 = inlined_call_operand.vmem [shape: f32[1,128], index: 4, kind: input, shape index: {}]
  %s5 = inlined_call_operand.vmem [shape: f32[1,128], index: 5, kind: input, shape index: {}]
  %s6 = inlined_call_operand.hbm [shape: f32[1,16,128], index: 6, kind: output, shape index: {}]
  %s7 = sld [smem:[#allocation0]]
  $region50: #{tpu_custom_call.1} parent=0
    _
  %s9 = ssub.s32 1, %s7
  %s10 = scalar_select 0, %s9, %s7
  $region1: #{tpu_custom_call.1} parent=0
    #allocation2 [shape = 'u8[4096]{0}', space=vmem, size = 0x1000, scoped, tag = 'input window, operand 0, single buffered']
    #allocation3 [shape = 's32[1]{0}', space=sflag, size = 0x4, scoped, tag = 'scoped memory for tpu_custom_call.1']
    #allocation4 [shape = 's32[1]{0}', space=sflag, size = 0x4, scoped, tag = 'scoped memory for tpu_custom_call.1']
    #allocation5 [shape = 'u8[8192]{0}', space=vmem, size = 0x2000, scoped, tag = 'input window, operand 1, single buffered']
    #allocation6 [shape = 's32[1]{0}', space=sflag, size = 0x4, scoped, tag = 'scoped memory for tpu_custom_call.1']
    #allocation7 [shape = 'u8[98304]{0}', space=vmem, size = 0x18000, scoped, tag = 'input window, operand 2, single buffered']
    #allocation8 [shape = 'u8[98304]{0}', space=vmem, size = 0x18000, scoped, tag = 'input window, operand 3, single buffered']
    #allocation9 [shape = 's32[1]{0}', space=sflag, size = 0x4, scoped, tag = 'scoped memory for tpu_custom_call.1']
    #allocation10 [shape = 'u8[8192]{0}', space=vmem, size = 0x2000, scoped, tag = 'output window, operand 0, single buffered']
    %11 = vsyncpa [#allocation3], 0
    %12 = vsyncpa [#allocation6], 0
    %13 = vsyncpa [#allocation9], 0
    %14 = vsyncpa [#allocation4], 0
    // Predicated region
    $region2: #{tpu_custom_call.1} parent=1 // pred_check
      _
    $region3: #{tpu_custom_call.1} parent=1 // pred_check_branch
      %16 = sbr.rel (0) target = $region5
    $region4: #{tpu_custom_call.1} parent=1 // pred_region
      %18 = vsyncadd [#allocation3], 0
      %s19 = sshll.u32 %s0, 4
      %s20 = int_to_ptr.hbm [resolvable:$true] %s19
      %s21 = sshll.u32 [#allocation2], 4
      %s22 = int_to_ptr.vmem [resolvable:$true] %s21
      %27 = dma.hbm_to_vmem [thread:$0]  %s20, 128, %s22, [#allocation3], 64, 64, 4
    $region5: #{tpu_custom_call.1} parent=1 // pred_fallthru
      _
    // Predicated region
    $region6: #{tpu_custom_call.1} parent=1 // pred_check
      _
    $region7: #{tpu_custom_call.1} parent=1 // pred_check_branch
      %29 = sbr.rel (0) target = $region9
    $region8: #{tpu_custom_call.1} parent=1 // pred_region
      %31 = vsyncadd [#allocation6], 0
      %s32 = sshll.u32 %s1, 4
      %s33 = int_to_ptr.hbm [resolvable:$true] %s32
      %s34 = sshll.u32 [#allocation5], 4
      %s35 = int_to_ptr.vmem [resolvable:$true] %s34
      %40 = dma.hbm_to_vmem [thread:$0]  %s33, 256, %s35, [#allocation6], 64, 64, 4
    $region9: #{tpu_custom_call.1} parent=1 // pred_fallthru
      _
    // Predicated region
    $region10: #{tpu_custom_call.1} parent=1 // pred_check
      _
    $region11: #{tpu_custom_call.1} parent=1 // pred_check_branch
      %42 = sbr.rel (0) target = $region13
    $region12: #{tpu_custom_call.1} parent=1 // pred_region
      %44 = vsyncadd [#allocation6], 0
      %s45 = sshll.u32 %s2, 4
      %s46 = int_to_ptr.hbm [resolvable:$true] %s45
      %s47 = sshll.u32 [#allocation7], 4
      %s48 = int_to_ptr.vmem [resolvable:$true] %s47
      %53 = dma.hbm_to_vmem [thread:$0]  %s46, 3072, %s48, [#allocation6], 64, 64, 4
    $region13: #{tpu_custom_call.1} parent=1 // pred_fallthru
      _
    // Predicated region
    $region14: #{tpu_custom_call.1} parent=1 // pred_check
      _
    $region15: #{tpu_custom_call.1} parent=1 // pred_check_branch
      %55 = sbr.rel (0) target = $region17
    $region16: #{tpu_custom_call.1} parent=1 // pred_region
      %57 = vsyncadd [#allocation9], 0
      %s58 = sshll.u32 %s3, 4
      %s59 = int_to_ptr.hbm [resolvable:$true] %s58
      %s60 = sshll.u32 [#allocation8], 4
      %s61 = int_to_ptr.vmem [resolvable:$true] %s60
      %66 = dma.hbm_to_vmem [thread:$0]  %s59, 3072, %s61, [#allocation9], 64, 64, 4
    $region17: #{tpu_custom_call.1} parent=1 // pred_fallthru
      _
    // Predicated region
    $region18: #{tpu_custom_call.1} parent=1 // pred_check
      _
    $region19: #{tpu_custom_call.1} parent=1 // pred_check_branch
      %68 = sbr.rel (0) target = $region21
    $region20: #{tpu_custom_call.1} parent=1 // pred_region
      _
    $region21: #{tpu_custom_call.1} parent=1 // pred_fallthru
      _
    // Predicated region
    $region22: #{tpu_custom_call.1} parent=1 // pred_check
      _
    $region23: #{tpu_custom_call.1} parent=1 // pred_check_branch
      %70 = sbr.rel (0) target = $region25
    $region24: #{tpu_custom_call.1} parent=1 // pred_region
      _
    $region25: #{tpu_custom_call.1} parent=1 // pred_fallthru
      _
    // Predicated region
    $region26: #{tpu_custom_call.1} parent=1 // pred_check
      _
    $region27: #{tpu_custom_call.1} parent=1 // pred_check_branch
      %72 = sbr.rel (0) target = $region29
    $region28: #{tpu_custom_call.1} parent=1 // pred_region
      %74 = dma.done [#allocation3], 128
    $region29: #{tpu_custom_call.1} parent=1 // pred_fallthru
      _
    // Predicated region
    $region30: #{tpu_custom_call.1} parent=1 // pred_check
      _
    $region31: #{tpu_custom_call.1} parent=1 // pred_check_branch
      %76 = sbr.rel (0) target = $region33
    $region32: #{tpu_custom_call.1} parent=1 // pred_region
      %78 = dma.done [#allocation6], 256
    $region33: #{tpu_custom_call.1} parent=1 // pred_fallthru
      _
    // Predicated region
    $region34: #{tpu_custom_call.1} parent=1 // pred_check
      _
    $region35: #{tpu_custom_call.1} parent=1 // pred_check_branch
      %80 = sbr.rel (0) target = $region37
    $region36: #{tpu_custom_call.1} parent=1 // pred_region
      %82 = dma.done [#allocation6], 3072
    $region37: #{tpu_custom_call.1} parent=1 // pred_fallthru
      _
    // Predicated region
    $region38: #{tpu_custom_call.1} parent=1 // pred_check
      _
    $region39: #{tpu_custom_call.1} parent=1 // pred_check_branch
      %84 = sbr.rel (0) target = $region41
    $region40: #{tpu_custom_call.1} parent=1 // pred_region
      %86 = dma.done [#allocation9], 3072
    $region41: #{tpu_custom_call.1} parent=1 // pred_fallthru
      _
    %v88 = vld [vmem:[#allocation2] sm:$0xf]
    %v89 = vld [vmem:[#allocation2 + $0x4] sm:$0xf]
    %v90 = vld [vmem:[#allocation5] sm:$0xf]
    %v91 = vld [vmem:[#allocation5 + $0x4] sm:$0xf]
    %s92 = scalar_lea.vmem [#allocation5], 8
    %v93 = vld [vmem:[%s92] sm:$0xf]
    %v94 = vld [vmem:[%s92 + $0x4] sm:$0xf]
    %v97 = vunpack.c.l.b16 %v90
    %v98 = vunpack.c.l.b16 %v91
    %v99 = vpack.c.b16 %v98, %v97
    %v102 = vunpack.c.l.b16 %v88
    %v103 = vunpack.c.l.b16 %v89
    %v104 = vpack.c.b16 %v103, %v102
    %vm106 = vcmask 130048
    %v108 = vsel %vm106, %v99, 0
    %110 = vmatpush.bf16.msra.mxu0 0
    %111 = vmatpush.bf16.msra.mxu0 0
    %112 = vmatpush.bf16.msra.mxu0 0
    %113 = vmatpush.bf16.msra.mxu0 0
    %114 = vmatpush.bf16.msra.mxu0 0
    %115 = vmatpush.bf16.msra.mxu0 0
    %116 = vmatpush.bf16.msra.mxu0 0
    %117 = vmatpush.bf16.msra.mxu0 %v104
    %118 = vmatmul.bf16.gmra.mxu0 %v108
    %v119 = vpop.f32.mrf.mxu0
    %v120 = vadd.f32 0.0, %v119
    %v121 = vpop.f32.mrf.mxu0
    %v122 = vadd.f32 0.0, %v121
    %123 = vdwg.mxu0
    %v124 = vpack.c.bf16 %v122, %v120
    %v127 = vunpack.c.l.b16 %v93
    %v128 = vunpack.c.l.b16 %v94
    %v129 = vpack.c.b16 %v128, %v127
    %v131 = vsel %vm106, %v129, 0
    %133 = vmatpush.bf16.msra.mxu0 0
    %134 = vmatpush.bf16.msra.mxu0 0
    %135 = vmatpush.bf16.msra.mxu0 0
    %136 = vmatpush.bf16.msra.mxu0 0
    %137 = vmatpush.bf16.msra.mxu0 0
    %138 = vmatpush.bf16.msra.mxu0 0
    %139 = vmatpush.bf16.msra.mxu0 0
    %140 = vmatpush.bf16.msra.mxu0 %v104
    %141 = vmatmul.bf16.gmra.mxu0 %v131
    %v142 = vpop.f32.mrf.mxu0
    %v143 = vadd.f32 0.0, %v142
    %v144 = vpop.f32.mrf.mxu0
    %v145 = vadd.f32 0.0, %v144
    %146 = vdwg.mxu0
    %v147 = vpack.c.bf16 %v145, %v143
    %v148 = vld [vmem:[#allocation7] sm:$0xf]
    %v149 = vld [vmem:[#allocation7 + $0x4] sm:$0xf]
    %v150 = vld [vmem:[#allocation7 + $0x8] sm:$0xf]
    %v151 = vld [vmem:[#allocation7 + $0xc] sm:$0xf]
    %v152 = vld [vmem:[#allocation7 + $0x10] sm:$0xf]
    %v153 = vld [vmem:[#allocation7 + $0x14] sm:$0xf]
    %v154 = vld [vmem:[#allocation7 + $0x18] sm:$0xf]
    %v155 = vld [vmem:[#allocation7 + $0x1c] sm:$0xf]
    %v156 = vld [vmem:[#allocation7 + $0x20] sm:$0xf]
    %v157 = vld [vmem:[#allocation7 + $0x24] sm:$0xf]
    %v158 = vld [vmem:[#allocation7 + $0x28] sm:$0xf]
    %v159 = vld [vmem:[#allocation7 + $0x2c] sm:$0xf]
    %v160 = vld [vmem:[#allocation7 + $0x30] sm:$0xf]
    %v161 = vld [vmem:[#allocation7 + $0x34] sm:$0xf]
    %v162 = vld [vmem:[#allocation7 + $0x38] sm:$0xf]
    %v163 = vld [vmem:[#allocation7 + $0x3c] sm:$0xf]
    %s164 = scalar_lea.vmem [#allocation7], 64
    %v165 = vld [vmem:[%s164] sm:$0xf]
    %v166 = vld [vmem:[%s164 + $0x4] sm:$0xf]
    %v167 = vld [vmem:[%s164 + $0x8] sm:$0xf]
    %v168 = vld [vmem:[%s164 + $0xc] sm:$0xf]
    %v169 = vld [vmem:[%s164 + $0x10] sm:$0xf]
    %v170 = vld [vmem:[%s164 + $0x14] sm:$0xf]
    %v171 = vld [vmem:[%s164 + $0x18] sm:$0xf]
    %v172 = vld [vmem:[%s164 + $0x1c] sm:$0xf]
    %v173 = vld [vmem:[%s164 + $0x20] sm:$0xf]
    %v174 = vld [vmem:[%s164 + $0x24] sm:$0xf]
    %v175 = vld [vmem:[%s164 + $0x28] sm:$0xf]
    %v176 = vld [vmem:[%s164 + $0x2c] sm:$0xf]
    %v177 = vld [vmem:[%s164 + $0x30] sm:$0xf]
    %v178 = vld [vmem:[%s164 + $0x34] sm:$0xf]
    %v179 = vld [vmem:[%s164 + $0x38] sm:$0xf]
    %v180 = vld [vmem:[%s164 + $0x3c] sm:$0xf]
    %v197 = vunpack.c.l.b16 %v165
    %v198 = vunpack.c.l.b16 %v166
    %v199 = vunpack.c.l.b16 %v167
    %v200 = vunpack.c.l.b16 %v168
    %v201 = vunpack.c.l.b16 %v169
    %v202 = vunpack.c.l.b16 %v170
    %v203 = vunpack.c.l.b16 %v171
    %v204 = vunpack.c.l.b16 %v172
    %v205 = vunpack.c.l.b16 %v173
    %v206 = vunpack.c.l.b16 %v174
    %v207 = vunpack.c.l.b16 %v175
    %v208 = vunpack.c.l.b16 %v176
    %v209 = vunpack.c.l.b16 %v177
    %v210 = vunpack.c.l.b16 %v178
    %v211 = vunpack.c.l.b16 %v179
    %v212 = vunpack.c.l.b16 %v180
    %v213 = vpack.c.b16 %v198, %v197
    %v214 = vpack.c.b16 %v200, %v199
    %v215 = vpack.c.b16 %v202, %v201
    %v216 = vpack.c.b16 %v204, %v203
    %v217 = vpack.c.b16 %v206, %v205
    %v218 = vpack.c.b16 %v208, %v207
    %v219 = vpack.c.b16 %v210, %v209
    %v220 = vpack.c.b16 %v212, %v211
    %229 = vmatpush.bf16.msra.mxu0 %v220
    %230 = vmatpush.bf16.msra.mxu0 %v219
    %231 = vmatpush.bf16.msra.mxu0 %v218
    %232 = vmatpush.bf16.msra.mxu0 %v217
    %233 = vmatpush.bf16.msra.mxu0 %v216
    %234 = vmatpush.bf16.msra.mxu0 %v215
    %235 = vmatpush.bf16.msra.mxu0 %v214
    %236 = vmatpush.bf16.msra.mxu0 %v213
    %237 = vmatmul.bf16.gmra.mxu0 %v104
    %v238 = vpop.f32.mrf.mxu0
    %v239 = vadd.f32 0.0, %v238
    %v240 = vpop.f32.mrf.mxu0
    %v241 = vadd.f32 0.0, %v240
    %242 = vdwg.mxu0
    %v259 = vunpack.c.l.b16 %v148
    %v260 = vunpack.c.l.b16 %v149
    %v261 = vunpack.c.l.b16 %v150
    %v262 = vunpack.c.l.b16 %v151
    %v263 = vunpack.c.l.b16 %v152
    %v264 = vunpack.c.l.b16 %v153
    %v265 = vunpack.c.l.b16 %v154
    %v266 = vunpack.c.l.b16 %v155
    %v267 = vunpack.c.l.b16 %v156
    %v268 = vunpack.c.l.b16 %v157
    %v269 = vunpack.c.l.b16 %v158
    %v270 = vunpack.c.l.b16 %v159
    %v271 = vunpack.c.l.b16 %v160
    %v272 = vunpack.c.l.b16 %v161
    %v273 = vunpack.c.l.b16 %v162
    %v274 = vunpack.c.l.b16 %v163
    %v275 = vpack.c.b16 %v260, %v259
    %v276 = vpack.c.b16 %v262, %v261
    %v277 = vpack.c.b16 %v264, %v263
    %v278 = vpack.c.b16 %v266, %v265
    %v279 = vpack.c.b16 %v268, %v267
    %v280 = vpack.c.b16 %v270, %v269
    %v281 = vpack.c.b16 %v272, %v271
    %v282 = vpack.c.b16 %v274, %v273
    %291 = vmatpush.bf16.msra.mxu0 %v282
    %292 = vmatpush.bf16.msra.mxu0 %v281
    %293 = vmatpush.bf16.msra.mxu0 %v280
    %294 = vmatpush.bf16.msra.mxu0 %v279
    %295 = vmatpush.bf16.msra.mxu0 %v278
    %296 = vmatpush.bf16.msra.mxu0 %v277
    %297 = vmatpush.bf16.msra.mxu0 %v276
    %298 = vmatpush.bf16.msra.mxu0 %v275
    %299 = vmatmul.bf16.gmra.mxu0 %v124
    %v300 = vpop.f32.mrf.mxu0
    %v301 = vadd.f32 %v239, %v300
    %v302 = vpop.f32.mrf.mxu0
    %v303 = vadd.f32 %v241, %v302
    %304 = vdwg.mxu0
    %s305 = scalar_lea.vmem [#allocation7], 128
    %v306 = vld [vmem:[%s305] sm:$0xf]
    %v307 = vld [vmem:[%s305 + $0x4] sm:$0xf]
    %v308 = vld [vmem:[%s305 + $0x8] sm:$0xf]
    %v309 = vld [vmem:[%s305 + $0xc] sm:$0xf]
    %v310 = vld [vmem:[%s305 + $0x10] sm:$0xf]
    %v311 = vld [vmem:[%s305 + $0x14] sm:$0xf]
    %v312 = vld [vmem:[%s305 + $0x18] sm:$0xf]
    %v313 = vld [vmem:[%s305 + $0x1c] sm:$0xf]
    %v314 = vld [vmem:[%s305 + $0x20] sm:$0xf]
    %v315 = vld [vmem:[%s305 + $0x24] sm:$0xf]
    %v316 = vld [vmem:[%s305 + $0x28] sm:$0xf]
    %v317 = vld [vmem:[%s305 + $0x2c] sm:$0xf]
    %v318 = vld [vmem:[%s305 + $0x30] sm:$0xf]
    %v319 = vld [vmem:[%s305 + $0x34] sm:$0xf]
    %v320 = vld [vmem:[%s305 + $0x38] sm:$0xf]
    %v321 = vld [vmem:[%s305 + $0x3c] sm:$0xf]
    %v338 = vunpack.c.l.b16 %v306
    %v339 = vunpack.c.l.b16 %v307
    %v340 = vunpack.c.l.b16 %v308
    %v341 = vunpack.c.l.b16 %v309
    %v342 = vunpack.c.l.b16 %v310
    %v343 = vunpack.c.l.b16 %v311
    %v344 = vunpack.c.l.b16 %v312
    %v345 = vunpack.c.l.b16 %v313
    %v346 = vunpack.c.l.b16 %v314
    %v347 = vunpack.c.l.b16 %v315
    %v348 = vunpack.c.l.b16 %v316
    %v349 = vunpack.c.l.b16 %v317
    %v350 = vunpack.c.l.b16 %v318
    %v351 = vunpack.c.l.b16 %v319
    %v352 = vunpack.c.l.b16 %v320
    %v353 = vunpack.c.l.b16 %v321
    %v354 = vpack.c.b16 %v339, %v338
    %v355 = vpack.c.b16 %v341, %v340
    %v356 = vpack.c.b16 %v343, %v342
    %v357 = vpack.c.b16 %v345, %v344
    %v358 = vpack.c.b16 %v347, %v346
    %v359 = vpack.c.b16 %v349, %v348
    %v360 = vpack.c.b16 %v351, %v350
    %v361 = vpack.c.b16 %v353, %v352
    %370 = vmatpush.bf16.msra.mxu0 %v361
    %371 = vmatpush.bf16.msra.mxu0 %v360
    %372 = vmatpush.bf16.msra.mxu0 %v359
    %373 = vmatpush.bf16.msra.mxu0 %v358
    %374 = vmatpush.bf16.msra.mxu0 %v357
    %375 = vmatpush.bf16.msra.mxu0 %v356
    %376 = vmatpush.bf16.msra.mxu0 %v355
    %377 = vmatpush.bf16.msra.mxu0 %v354
    %378 = vmatmul.bf16.gmra.mxu0 %v147
    %v379 = vpop.f32.mrf.mxu0
    %v380 = vadd.f32 0.0, %v379
    %v381 = vpop.f32.mrf.mxu0
    %v382 = vadd.f32 0.0, %v381
    %383 = vdwg.mxu0
    %v384 = vadd.f32 %v301, %v380
    %v385 = vadd.f32 %v303, %v382
    %v386 = vld [vmem:[%s4] sm:$0x1]
    %v388 = vperm.slane %v386, 0
    %v390 = vadd.f32 %v384, %v388
    %v391 = vadd.f32 %v385, %v388
    %v392 = vmax.f32 %v390, 0.0
    %v393 = vmax.f32 %v391, 0.0
    %v394 = vpack.c.bf16 %v393, %v392
    %395 = vmatpush.bf16.msra.mxu0 0
    %396 = vmatpush.bf16.msra.mxu0 0
    %397 = vmatpush.bf16.msra.mxu0 0
    %398 = vmatpush.bf16.msra.mxu0 0
    %399 = vmatpush.bf16.msra.mxu0 0
    %400 = vmatpush.bf16.msra.mxu0 0
    %401 = vmatpush.bf16.msra.mxu0 0
    %402 = vmatpush.bf16.msra.mxu0 %v394
    %403 = vmatmul.bf16.gmra.mxu0 %v108
    %v404 = vpop.f32.mrf.mxu0
    %v405 = vadd.f32 0.0, %v404
    %v406 = vpop.f32.mrf.mxu0
    %v407 = vadd.f32 0.0, %v406
    %408 = vdwg.mxu0
    %v409 = vpack.c.bf16 %v407, %v405
    %410 = vmatpush.bf16.msra.mxu0 0
    %411 = vmatpush.bf16.msra.mxu0 0
    %412 = vmatpush.bf16.msra.mxu0 0
    %413 = vmatpush.bf16.msra.mxu0 0
    %414 = vmatpush.bf16.msra.mxu0 0
    %415 = vmatpush.bf16.msra.mxu0 0
    %416 = vmatpush.bf16.msra.mxu0 0
    %417 = vmatpush.bf16.msra.mxu0 %v394
    %418 = vmatmul.bf16.gmra.mxu0 %v131
    %v419 = vpop.f32.mrf.mxu0
    %v420 = vadd.f32 0.0, %v419
    %v421 = vpop.f32.mrf.mxu0
    %v422 = vadd.f32 0.0, %v421
    %423 = vdwg.mxu0
    %v424 = vpack.c.bf16 %v422, %v420
    %v425 = vld [vmem:[#allocation8] sm:$0xf]
    %v426 = vld [vmem:[#allocation8 + $0x4] sm:$0xf]
    %v427 = vld [vmem:[#allocation8 + $0x8] sm:$0xf]
    %v428 = vld [vmem:[#allocation8 + $0xc] sm:$0xf]
    %v429 = vld [vmem:[#allocation8 + $0x10] sm:$0xf]
    %v430 = vld [vmem:[#allocation8 + $0x14] sm:$0xf]
    %v431 = vld [vmem:[#allocation8 + $0x18] sm:$0xf]
    %v432 = vld [vmem:[#allocation8 + $0x1c] sm:$0xf]
    %v433 = vld [vmem:[#allocation8 + $0x20] sm:$0xf]
    %v434 = vld [vmem:[#allocation8 + $0x24] sm:$0xf]
    %v435 = vld [vmem:[#allocation8 + $0x28] sm:$0xf]
    %v436 = vld [vmem:[#allocation8 + $0x2c] sm:$0xf]
    %v437 = vld [vmem:[#allocation8 + $0x30] sm:$0xf]
    %v438 = vld [vmem:[#allocation8 + $0x34] sm:$0xf]
    %v439 = vld [vmem:[#allocation8 + $0x38] sm:$0xf]
    %v440 = vld [vmem:[#allocation8 + $0x3c] sm:$0xf]
    %s441 = scalar_lea.vmem [#allocation8], 64
    %v442 = vld [vmem:[%s441] sm:$0xf]
    %v443 = vld [vmem:[%s441 + $0x4] sm:$0xf]
    %v444 = vld [vmem:[%s441 + $0x8] sm:$0xf]
    %v445 = vld [vmem:[%s441 + $0xc] sm:$0xf]
    %v446 = vld [vmem:[%s441 + $0x10] sm:$0xf]
    %v447 = vld [vmem:[%s441 + $0x14] sm:$0xf]
    %v448 = vld [vmem:[%s441 + $0x18] sm:$0xf]
    %v449 = vld [vmem:[%s441 + $0x1c] sm:$0xf]
    %v450 = vld [vmem:[%s441 + $0x20] sm:$0xf]
    %v451 = vld [vmem:[%s441 + $0x24] sm:$0xf]
    %v452 = vld [vmem:[%s441 + $0x28] sm:$0xf]
    %v453 = vld [vmem:[%s441 + $0x2c] sm:$0xf]
    %v454 = vld [vmem:[%s441 + $0x30] sm:$0xf]
    %v455 = vld [vmem:[%s441 + $0x34] sm:$0xf]
    %v456 = vld [vmem:[%s441 + $0x38] sm:$0xf]
    %v457 = vld [vmem:[%s441 + $0x3c] sm:$0xf]
    %v474 = vunpack.c.l.b16 %v442
    %v475 = vunpack.c.l.b16 %v443
    %v476 = vunpack.c.l.b16 %v444
    %v477 = vunpack.c.l.b16 %v445
    %v478 = vunpack.c.l.b16 %v446
    %v479 = vunpack.c.l.b16 %v447
    %v480 = vunpack.c.l.b16 %v448
    %v481 = vunpack.c.l.b16 %v449
    %v482 = vunpack.c.l.b16 %v450
    %v483 = vunpack.c.l.b16 %v451
    %v484 = vunpack.c.l.b16 %v452
    %v485 = vunpack.c.l.b16 %v453
    %v486 = vunpack.c.l.b16 %v454
    %v487 = vunpack.c.l.b16 %v455
    %v488 = vunpack.c.l.b16 %v456
    %v489 = vunpack.c.l.b16 %v457
    %v490 = vpack.c.b16 %v475, %v474
    %v491 = vpack.c.b16 %v477, %v476
    %v492 = vpack.c.b16 %v479, %v478
    %v493 = vpack.c.b16 %v481, %v480
    %v494 = vpack.c.b16 %v483, %v482
    %v495 = vpack.c.b16 %v485, %v484
    %v496 = vpack.c.b16 %v487, %v486
    %v497 = vpack.c.b16 %v489, %v488
    %506 = vmatpush.bf16.msra.mxu0 %v497
    %507 = vmatpush.bf16.msra.mxu0 %v496
    %508 = vmatpush.bf16.msra.mxu0 %v495
    %509 = vmatpush.bf16.msra.mxu0 %v494
    %510 = vmatpush.bf16.msra.mxu0 %v493
    %511 = vmatpush.bf16.msra.mxu0 %v492
    %512 = vmatpush.bf16.msra.mxu0 %v491
    %513 = vmatpush.bf16.msra.mxu0 %v490
    %514 = vmatmul.bf16.gmra.mxu0 %v394
    %v515 = vpop.f32.mrf.mxu0
    %v516 = vadd.f32 0.0, %v515
    %v517 = vpop.f32.mrf.mxu0
    %v518 = vadd.f32 0.0, %v517
    %519 = vdwg.mxu0
    %v536 = vunpack.c.l.b16 %v425
    %v537 = vunpack.c.l.b16 %v426
    %v538 = vunpack.c.l.b16 %v427
    %v539 = vunpack.c.l.b16 %v428
    %v540 = vunpack.c.l.b16 %v429
    %v541 = vunpack.c.l.b16 %v430
    %v542 = vunpack.c.l.b16 %v431
    %v543 = vunpack.c.l.b16 %v432
    %v544 = vunpack.c.l.b16 %v433
    %v545 = vunpack.c.l.b16 %v434
    %v546 = vunpack.c.l.b16 %v435
    %v547 = vunpack.c.l.b16 %v436
    %v548 = vunpack.c.l.b16 %v437
    %v549 = vunpack.c.l.b16 %v438
    %v550 = vunpack.c.l.b16 %v439
    %v551 = vunpack.c.l.b16 %v440
    %v552 = vpack.c.b16 %v537, %v536
    %v553 = vpack.c.b16 %v539, %v538
    %v554 = vpack.c.b16 %v541, %v540
    %v555 = vpack.c.b16 %v543, %v542
    %v556 = vpack.c.b16 %v545, %v544
    %v557 = vpack.c.b16 %v547, %v546
    %v558 = vpack.c.b16 %v549, %v548
    %v559 = vpack.c.b16 %v551, %v550
    %568 = vmatpush.bf16.msra.mxu0 %v559
    %569 = vmatpush.bf16.msra.mxu0 %v558
    %570 = vmatpush.bf16.msra.mxu0 %v557
    %571 = vmatpush.bf16.msra.mxu0 %v556
    %572 = vmatpush.bf16.msra.mxu0 %v555
    %573 = vmatpush.bf16.msra.mxu0 %v554
    %574 = vmatpush.bf16.msra.mxu0 %v553
    %575 = vmatpush.bf16.msra.mxu0 %v552
    %576 = vmatmul.bf16.gmra.mxu0 %v409
    %v577 = vpop.f32.mrf.mxu0
    %v578 = vadd.f32 %v516, %v577
    %v579 = vpop.f32.mrf.mxu0
    %v580 = vadd.f32 %v518, %v579
    %581 = vdwg.mxu0
    %s582 = scalar_lea.vmem [#allocation8], 128
    %v583 = vld [vmem:[%s582] sm:$0xf]
    %v584 = vld [vmem:[%s582 + $0x4] sm:$0xf]
    %v585 = vld [vmem:[%s582 + $0x8] sm:$0xf]
    %v586 = vld [vmem:[%s582 + $0xc] sm:$0xf]
    %v587 = vld [vmem:[%s582 + $0x10] sm:$0xf]
    %v588 = vld [vmem:[%s582 + $0x14] sm:$0xf]
    %v589 = vld [vmem:[%s582 + $0x18] sm:$0xf]
    %v590 = vld [vmem:[%s582 + $0x1c] sm:$0xf]
    %v591 = vld [vmem:[%s582 + $0x20] sm:$0xf]
    %v592 = vld [vmem:[%s582 + $0x24] sm:$0xf]
    %v593 = vld [vmem:[%s582 + $0x28] sm:$0xf]
    %v594 = vld [vmem:[%s582 + $0x2c] sm:$0xf]
    %v595 = vld [vmem:[%s582 + $0x30] sm:$0xf]
    %v596 = vld [vmem:[%s582 + $0x34] sm:$0xf]
    %v597 = vld [vmem:[%s582 + $0x38] sm:$0xf]
    %v598 = vld [vmem:[%s582 + $0x3c] sm:$0xf]
    %v615 = vunpack.c.l.b16 %v583
    %v616 = vunpack.c.l.b16 %v584
    %v617 = vunpack.c.l.b16 %v585
    %v618 = vunpack.c.l.b16 %v586
    %v619 = vunpack.c.l.b16 %v587
    %v620 = vunpack.c.l.b16 %v588
    %v621 = vunpack.c.l.b16 %v589
    %v622 = vunpack.c.l.b16 %v590
    %v623 = vunpack.c.l.b16 %v591
    %v624 = vunpack.c.l.b16 %v592
    %v625 = vunpack.c.l.b16 %v593
    %v626 = vunpack.c.l.b16 %v594
    %v627 = vunpack.c.l.b16 %v595
    %v628 = vunpack.c.l.b16 %v596
    %v629 = vunpack.c.l.b16 %v597
    %v630 = vunpack.c.l.b16 %v598
    %v631 = vpack.c.b16 %v616, %v615
    %v632 = vpack.c.b16 %v618, %v617
    %v633 = vpack.c.b16 %v620, %v619
    %v634 = vpack.c.b16 %v622, %v621
    %v635 = vpack.c.b16 %v624, %v623
    %v636 = vpack.c.b16 %v626, %v625
    %v637 = vpack.c.b16 %v628, %v627
    %v638 = vpack.c.b16 %v630, %v629
    %647 = vmatpush.bf16.msra.mxu0 %v638
    %648 = vmatpush.bf16.msra.mxu0 %v637
    %649 = vmatpush.bf16.msra.mxu0 %v636
    %650 = vmatpush.bf16.msra.mxu0 %v635
    %651 = vmatpush.bf16.msra.mxu0 %v634
    %652 = vmatpush.bf16.msra.mxu0 %v633
    %653 = vmatpush.bf16.msra.mxu0 %v632
    %654 = vmatpush.bf16.msra.mxu0 %v631
    %655 = vmatmul.bf16.gmra.mxu0 %v424
    %v656 = vpop.f32.mrf.mxu0
    %v657 = vadd.f32 0.0, %v656
    %v658 = vpop.f32.mrf.mxu0
    %v659 = vadd.f32 0.0, %v658
    %660 = vdwg.mxu0
    %v661 = vadd.f32 %v578, %v657
    %v662 = vadd.f32 %v580, %v659
    %v663 = vld [vmem:[%s5] sm:$0x1]
    %v665 = vperm.slane %v663, 0
    %v667 = vadd.f32 %v661, %v665
    %v668 = vadd.f32 %v662, %v665
    %v669 = vunpack.c.l.bf16 %v88
    %v670 = vunpack.c.l.bf16 %v89
    %v671 = vadd.f32 %v667, %v669
    %v672 = vadd.f32 %v668, %v670
    %v673 = vmax.f32 %v671, 0.0
    %v674 = vmax.f32 %v672, 0.0
    %675 = vst [vmem:[#allocation10] sm:$0xff] %v673
    %676 = vst [vmem:[#allocation10 + $0x8] sm:$0xff] %v674
    // Predicated region
    $region42: #{tpu_custom_call.1} parent=1 // pred_check
      _
    $region43: #{tpu_custom_call.1} parent=1 // pred_check_branch
      %678 = sbr.rel (0) target = $region45
    $region44: #{tpu_custom_call.1} parent=1 // pred_region
      %680 = vsyncadd [#allocation4], 0
      %s681 = sshll.u32 [#allocation10], 4
      %s682 = int_to_ptr.vmem [resolvable:$true] %s681
      %s683 = sshll.u32 %s6, 4
      %s684 = int_to_ptr.hbm [resolvable:$true] %s683
      %689 = dma.vmem_to_hbm [thread:$0]  %s682, 256, %s684, [#allocation4], 128, 128, 8
    $region45: #{tpu_custom_call.1} parent=1 // pred_fallthru
      _
    // Predicated region
    $region46: #{tpu_custom_call.1} parent=1 // pred_check
      _
    $region47: #{tpu_custom_call.1} parent=1 // pred_check_branch
      %691 = sbr.rel (0) target = $region49
    $region48: #{tpu_custom_call.1} parent=1 // pred_region
      %693 = dma.done [#allocation4], 256
    $region49: #{tpu_custom_call.1} parent=1 // pred_fallthru
      _
    %694 = vsyncpa [#allocation3], 1
    %695 = vsyncpa [#allocation6], 1
    %696 = vsyncpa [#allocation9], 1
    %697 = vsyncpa [#allocation4], 1

</llo_original>
